<compile_context>
chip_gen: v5e
topology: v5e:2x2
jax: 0.10.0
libtpu: 0.0.40
codegen_flags: <defaults>
</compile_context>

<pallas_src>
import functools
import math

import jax
import jax.numpy as jnp
from jax.experimental import pallas as pl
from jax.experimental.pallas import tpu as pltpu


# ----------------------------------------------------------------------------
# small helpers
# ----------------------------------------------------------------------------
def _pick_block(dim, target):
    """Use `target` if it tiles `dim`, otherwise fall back to the full dim."""
    return target if (target <= dim and dim % target == 0) else dim


def _pick_vmem_limit():
    """Scoped-VMEM budget per generation (None -> keep compiler default)."""
    try:
        kind = jax.devices()[0].device_kind.lower()
    except Exception:
        return None
    if "v7" in kind:                                   # 64 MiB physical VMEM / TC
        return 48 * 1024 * 1024
    if any(t in kind for t in ("v4", "v5", "v6")):     # 128 MiB physical VMEM
        return 100 * 1024 * 1024
    return None


def _compiler_params(dim_sem):
    kwargs = dict(dimension_semantics=dim_sem)
    lim = _pick_vmem_limit()
    if lim is not None:
        kwargs["vmem_limit_bytes"] = lim
    return pltpu.CompilerParams(**kwargs)


def _swap_halves(t, half):
    """[x1, x2] -> [x2, x1] along the last axis (rotate_half; sign lives in sin)."""
    if (2 * half) % 128 == 0 and hasattr(pltpu, "roll"):
        return pltpu.roll(t, shift=half, axis=-1)       # single XLU roll, no copies
    # tiny (test-sized) head dims: lane-unaligned -> safe slice+concat fallback
    return jnp.concatenate([t[:, half:], t[:, :half]], axis=-1)


# ----------------------------------------------------------------------------
# kernel 1: RMSNorm -> fused QKV projection -> RoPE (+ q scaling)
# ----------------------------------------------------------------------------
def _qkv_rope_kernel(x_ref, ln1_ref, wq_ref, wk_ref, wv_ref, cos_ref, sin_ref,
                     q_ref, k_ref, v_ref,
                     *, n_heads, n_kv_heads, head_dim, eps, scale):
    # RMSNorm statistics in f32, normalized activations back in the model dtype.
    xf = x_ref[0].astype(jnp.float32)                                  # (bq, D)
    var = jnp.mean(xf * xf, axis=-1, keepdims=True)
    xn = ln1_ref[...] * (xf * jax.lax.rsqrt(var + eps)).astype(x_ref.dtype)

    # One big MXU matmul per projection (bf16 operands, f32 accumulation).
    q = jnp.dot(xn, wq_ref[...], preferred_element_type=jnp.float32)   # (bq, Hq*hd)
    k = jnp.dot(xn, wk_ref[...], preferred_element_type=jnp.float32)   # (bq, Hkv*hd)
    v = jnp.dot(xn, wv_ref[...], preferred_element_type=jnp.float32)   # (bq, Hkv*hd)

    cos = cos_ref[...]            # (bq, hd) f32
    sin_r = sin_ref[...]          # (bq, hd) f32, sign of rotate_half pre-folded
    half = head_dim // 2

    def rope(t):                  # (bq, hd) f32
        return t * cos + _swap_halves(t, half) * sin_r

    # Q: rope + folded 1/sqrt(hd); written head-separated (no concatenate).
    for h in range(n_heads):
        sl = slice(h * head_dim, (h + 1) * head_dim)
        q_ref[0, h] = (rope(q[:, sl]) * scale).astype(q_ref.dtype)
    # K: rope applied ONCE per kv head (not once per query head).  V: copy.
    for h in range(n_kv_heads):
        sl = slice(h * head_dim, (h + 1) * head_dim)
        k_ref[0, h] = rope(k[:, sl]).astype(k_ref.dtype)
        v_ref[0, h] = v[:, sl].astype(v_ref.dtype)


# ----------------------------------------------------------------------------
# kernel 2: flash attention with online softmax + in-kernel causal mask (GQA)
# ----------------------------------------------------------------------------
def _flash_attn_kernel(q_ref, k_ref, v_ref, o_ref, m_sc, l_sc, acc_sc,
                       *, block_q, block_kv):
    qi = pl.program_id(2)
    ki = pl.program_id(3)

    @pl.when(ki == 0)
    def _init():
        m_sc[...] = jnp.full(m_sc.shape, -1e30, jnp.float32)  # finite sentinel
        l_sc[...] = jnp.zeros(l_sc.shape, jnp.float32)
        acc_sc[...] = jnp.zeros(acc_sc.shape, jnp.float32)

    # Causal block skip: only KV blocks that intersect the lower triangle.
    @pl.when(ki * block_kv <= qi * block_q + (block_q - 1))
    def _update():
        q = q_ref[0, 0]                                        # (bq, hd), pre-scaled
        k = k_ref[0, 0]                                        # (bkv, hd)
        s = jnp.dot(q, k.T, preferred_element_type=jnp.float32)  # (bq, bkv) f32

        # causal mask from iota (no HBM mask traffic)
        row = qi * block_q + jax.lax.broadcasted_iota(jnp.int32, s.shape, 0)
        col = ki * block_kv + jax.lax.broadcasted_iota(jnp.int32, s.shape, 1)
        s = jnp.where(row >= col, s, -1e9)

        m_prev = m_sc[...]
        m_new = jnp.maximum(m_prev, jnp.max(s, axis=-1, keepdims=True))
        alpha = jnp.exp(m_prev - m_new)
        p = jnp.exp(s - m_new)
        l_sc[...] = alpha * l_sc[...] + jnp.sum(p, axis=-1, keepdims=True)
        acc_sc[...] = alpha * acc_sc[...] + jnp.dot(
            p.astype(v_ref.dtype), v_ref[0, 0], preferred_element_type=jnp.float32)
        m_sc[...] = m_new

    @pl.when(ki == pl.num_programs(3) - 1)
    def _finalize():
        if hasattr(pl, "reciprocal"):
            inv = pl.reciprocal(l_sc[...], approx=True)        # EUP slot, ~free
        else:
            inv = 1.0 / l_sc[...]
        o_ref[0, 0] = (acc_sc[...] * inv).astype(o_ref.dtype)


# ----------------------------------------------------------------------------
# kernel 3: o_proj + residual + RMSNorm + SwiGLU MLP (tiled over I) + residual
# ----------------------------------------------------------------------------
def _oproj_mlp_kernel(x_ref, ctx_ref, wo_ref, ln2_ref, wg_ref, wu_ref, wd_ref,
                      o_ref, h1_sc, hn_sc, acc_sc, *, eps):
    ib = pl.program_id(2)

    @pl.when(ib == 0)
    def _prologue():
        attn = jnp.dot(ctx_ref[0], wo_ref[...], preferred_element_type=jnp.float32)
        h1 = x_ref[0].astype(jnp.float32) + attn               # residual 1 (f32)
        h1_sc[...] = h1
        var = jnp.mean(h1 * h1, axis=-1, keepdims=True)
        hn_sc[...] = (ln2_ref[...] *
                      (h1 * jax.lax.rsqrt(var + eps)).astype(hn_sc.dtype)
                      ).astype(hn_sc.dtype)
        acc_sc[...] = jnp.zeros(acc_sc.shape, jnp.float32)

    # One I-tile of the SwiGLU MLP; partial down-projection accumulated in VMEM.
    hn = hn_sc[...]                                            # (br, D) model dtype
    gate = jnp.dot(hn, wg_ref[...], preferred_element_type=jnp.float32)  # (br, bi)
    up = jnp.dot(hn, wu_ref[...], preferred_element_type=jnp.float32)
    act = gate * jax.nn.sigmoid(gate) * up                     # SiLU(gate)*up, f32
    acc_sc[...] += jnp.dot(act.astype(wd_ref.dtype), wd_ref[...],
                           preferred_element_type=jnp.float32)

    @pl.when(ib == pl.num_programs(2) - 1)
    def _epilogue():
        o_ref[0] = (h1_sc[...] + acc_sc[...]).astype(o_ref.dtype)   # residual 2


# ----------------------------------------------------------------------------
# wrapper
# ----------------------------------------------------------------------------
def mistral_decoder_layer(x, cos, sin, params, *, n_heads, n_kv_heads, eps,
                          block_q=256, block_kv=512, block_i=1024):
    B, S, D = x.shape
    head_dim = D // n_heads
    n_rep = n_heads // n_kv_heads
    dq = n_heads * head_dim
    dkv = n_kv_heads * head_dim
    I = params["w_gate"].shape[1]
    half = head_dim // 2
    scale = 1.0 / math.sqrt(head_dim)

    bq = _pick_block(S, block_q)         # query / row block
    bkv = _pick_block(S, block_kv)       # kv block
    bi = _pick_block(I, block_i)         # intermediate block
    # NOTE(v7x): with 64 MiB VMEM, shrink block_i (e.g. 512) and block_kv.

    # rotate_half(t)*sin == roll(t, hd/2)*signed_sin with signed_sin = [-sin1, sin2]
    sin_r = jnp.concatenate([-sin[:, :half], sin[:, half:]], axis=-1)
    cos32 = cos.astype(jnp.float32)
    sin_r = sin_r.astype(jnp.float32)

    # ---- kernel 1: RMSNorm + QKV + RoPE ------------------------------------
    q4, k4, v4 = pl.pallas_call(
        functools.partial(_qkv_rope_kernel, n_heads=n_heads,
                          n_kv_heads=n_kv_heads, head_dim=head_dim,
                          eps=eps, scale=scale),
        out_shape=(
            jax.ShapeDtypeStruct((B, n_heads, S, head_dim), x.dtype),
            jax.ShapeDtypeStruct((B, n_kv_heads, S, head_dim), x.dtype),
            jax.ShapeDtypeStruct((B, n_kv_heads, S, head_dim), x.dtype),
        ),
        grid_spec=pltpu.PrefetchScalarGridSpec(
            num_scalar_prefetch=0,
            grid=(B, S // bq),
            in_specs=[
                pl.BlockSpec((1, bq, D), lambda b, i: (b, i, 0)),      # x
                pl.BlockSpec((1, D), lambda b, i: (0, 0)),             # ln1 weight
                pl.BlockSpec((D, dq), lambda b, i: (0, 0)),            # w_q
                pl.BlockSpec((D, dkv), lambda b, i: (0, 0)),           # w_k
                pl.BlockSpec((D, dkv), lambda b, i: (0, 0)),           # w_v
                pl.BlockSpec((bq, head_dim), lambda b, i: (i, 0)),     # cos
                pl.BlockSpec((bq, head_dim), lambda b, i: (i, 0)),     # signed sin
            ],
            out_specs=[
                pl.BlockSpec((1, n_heads, bq, head_dim), lambda b, i: (b, 0, i, 0)),
                pl.BlockSpec((1, n_kv_heads, bq, head_dim), lambda b, i: (b, 0, i, 0)),
                pl.BlockSpec((1, n_kv_heads, bq, head_dim), lambda b, i: (b, 0, i, 0)),
            ],
        ),
        compiler_params=_compiler_params(("parallel", "parallel")),
    )(x, params["ln1_w"], params["w_q"], params["w_k"], params["w_v"],
      cos32, sin_r)

    # ---- kernel 2: flash attention (GQA via index_map) ----------------------
    ctx4 = pl.pallas_call(
        functools.partial(_flash_attn_kernel, block_q=bq, block_kv=bkv),
        out_shape=jax.ShapeDtypeStruct((B, n_heads, S, head_dim), x.dtype),
        grid_spec=pltpu.PrefetchScalarGridSpec(
            num_scalar_prefetch=0,
            grid=(B, n_heads, S // bq, S // bkv),
            in_specs=[
                pl.BlockSpec((1, 1, bq, head_dim),
                             lambda b, h, qi, ki: (b, h, qi, 0)),
                pl.BlockSpec((1, 1, bkv, head_dim),
                             lambda b, h, qi, ki: (b, h // n_rep, ki, 0)),
                pl.BlockSpec((1, 1, bkv, head_dim),
                             lambda b, h, qi, ki: (b, h // n_rep, ki, 0)),
            ],
            out_specs=pl.BlockSpec((1, 1, bq, head_dim),
                                   lambda b, h, qi, ki: (b, h, qi, 0)),
            scratch_shapes=[
                pltpu.VMEM((bq, 1), jnp.float32),          # running max
                pltpu.VMEM((bq, 1), jnp.float32),          # running denom
                pltpu.VMEM((bq, head_dim), jnp.float32),   # output accumulator
            ],
        ),
        compiler_params=_compiler_params(
            ("parallel", "parallel", "parallel", "arbitrary")),
    )(q4, k4, v4)

    # layout plumbing only: (B, H, S, hd) -> (B, S, D) for the output projection
    ctx = ctx4.transpose(0, 2, 1, 3).reshape(B, S, D)

    # ---- kernel 3: o_proj + residual + RMSNorm + MLP (I-tiled) + residual ---
    out = pl.pallas_call(
        functools.partial(_oproj_mlp_kernel, eps=eps),
        out_shape=jax.ShapeDtypeStruct((B, S, D), x.dtype),
        grid_spec=pltpu.PrefetchScalarGridSpec(
            num_scalar_prefetch=0,
            grid=(B, S // bq, I // bi),
            in_specs=[
                pl.BlockSpec((1, bq, D), lambda b, r, i: (b, r, 0)),   # x (residual)
                pl.BlockSpec((1, bq, D), lambda b, r, i: (b, r, 0)),   # attn ctx
                pl.BlockSpec((D, D), lambda b, r, i: (0, 0)),          # w_o
                pl.BlockSpec((1, D), lambda b, r, i: (0, 0)),          # ln2 weight
                pl.BlockSpec((D, bi), lambda b, r, i: (0, i)),         # w_gate tile
                pl.BlockSpec((D, bi), lambda b, r, i: (0, i)),         # w_up tile
                pl.BlockSpec((bi, D), lambda b, r, i: (i, 0)),         # w_down tile
            ],
            out_specs=pl.BlockSpec((1, bq, D), lambda b, r, i: (b, r, 0)),
            scratch_shapes=[
                pltpu.VMEM((bq, D), jnp.float32),   # h1 (residual carrier)
                pltpu.VMEM((bq, D), x.dtype),       # normalized hn (MXU operand)
                pltpu.VMEM((bq, D), jnp.float32),   # MLP accumulator
            ],
        ),
        compiler_params=_compiler_params(("parallel", "parallel", "arbitrary")),
    )(x, ctx, params["w_o"], params["ln2_w"], params["w_gate"], params["w_up"],
      params["w_down"])
    return out


# ----------------------------------------------------------------------------
# pure-JAX reference (f32) for correctness checking
# ----------------------------------------------------------------------------
def reference(x, cos, sin, params, *, n_heads, n_kv_heads, eps):
    x = x.astype(jnp.float32)
    p = {k: v.astype(jnp.float32) for k, v in params.items()}
    B, S, D = x.shape
    hd = D // n_heads
    n_rep = n_heads // n_kv_heads

    def rms(v, w):
        var = jnp.mean(v ** 2, axis=-1, keepdims=True)
        return w * (v * jax.lax.rsqrt(var + eps))

    xn = rms(x, p["ln1_w"])
    q = xn @ p["w_q"]
    k = xn @ p["w_k"]
    v = xn @ p["w_v"]
    q = q.reshape(B, S, n_heads, hd).transpose(0, 2, 1, 3)
    k = k.reshape(B, S, n_kv_heads, hd).transpose(0, 2, 1, 3)
    v = v.reshape(B, S, n_kv_heads, hd).transpose(0, 2, 1, 3)

    def rot_half(t):
        return jnp.concatenate([-t[..., hd // 2:], t[..., :hd // 2]], axis=-1)

    c = cos[None, None].astype(jnp.float32)
    s = sin[None, None].astype(jnp.float32)
    q = q * c + rot_half(q) * s
    k = k * c + rot_half(k) * s
    k = jnp.repeat(k, n_rep, axis=1)
    v = jnp.repeat(v, n_rep, axis=1)

    scores = jnp.einsum("bhqd,bhkd->bhqk", q, k) / math.sqrt(hd)
    causal = jnp.tril(jnp.ones((S, S), bool))
    scores = jnp.where(causal[None, None], scores, -1e9)
    pr = jax.nn.softmax(scores, axis=-1)
    o = jnp.einsum("bhqk,bhkd->bhqd", pr, v)
    o = o.transpose(0, 2, 1, 3).reshape(B, S, D) @ p["w_o"]

    h1 = x + o
    hn = rms(h1, p["ln2_w"])
    mlp = (jax.nn.silu(hn @ p["w_gate"]) * (hn @ p["w_up"])) @ p["w_down"]
    return h1 + mlp


if __name__ == "__main__":
    # small Mistral-like config
    B, S, D = 2, 8, 32
    n_heads, n_kv_heads = 4, 2
    head_dim = D // n_heads
    intermediate = 64
    rope_theta = 10000.0
    eps = 1e-6

    key = jax.random.PRNGKey(0)
    ks = jax.random.split(key, 10)
    init = lambda k, shape: (0.02 * jax.random.normal(k, shape)).astype(jnp.float32)

    params = {
        "ln1_w": jnp.ones((1, D), jnp.float32),
        "ln2_w": jnp.ones((1, D), jnp.float32),
        "w_q": init(ks[0], (D, n_heads * head_dim)),
        "w_k": init(ks[1], (D, n_kv_heads * head_dim)),
        "w_v": init(ks[2], (D, n_kv_heads * head_dim)),
        "w_o": init(ks[3], (D, D)),
        "w_gate": init(ks[4], (D, intermediate)),
        "w_up": init(ks[5], (D, intermediate)),
        "w_down": init(ks[6], (intermediate, D)),
    }
    x = jax.random.normal(ks[7], (B, S, D), jnp.float32)

    # rotary cos/sin cache at position_ids = arange(S)
    inv_freq = 1.0 / (rope_theta ** (jnp.arange(0, head_dim, 2, dtype=jnp.float32)
                                     / head_dim))
    t = jnp.arange(S, dtype=jnp.float32)
    freqs = jnp.einsum("i,j->ij", t, inv_freq)
    emb = jnp.concatenate([freqs, freqs], axis=-1)
    cos, sin = jnp.cos(emb), jnp.sin(emb)                       # (S, head_dim)

    # ---- f32 run: tight correctness check ----------------------------------
    out = mistral_decoder_layer(x, cos, sin, params,
                                n_heads=n_heads, n_kv_heads=n_kv_heads, eps=eps)
    out = jax.block_until_ready(out)
    ref = reference(x, cos, sin, params,
                    n_heads=n_heads, n_kv_heads=n_kv_heads, eps=eps)
    assert out.shape == (B, S, D)
    err = jnp.max(jnp.abs(out - ref))
    assert jnp.allclose(out, ref, atol=5e-3, rtol=5e-3), f"f32 max abs err {err}"

    # ---- bf16 run: bf16 MXU operands with f32 accumulation (loose check) ----
    to_bf16 = lambda a: a.astype(jnp.bfloat16)
    x_bf = to_bf16(x)
    params_bf = {k_: to_bf16(v_) for k_, v_ in params.items()}
    out_bf = mistral_decoder_layer(x_bf, cos, sin, params_bf,
                                   n_heads=n_heads, n_kv_heads=n_kv_heads, eps=eps)
    out_bf = jax.block_until_ready(out_bf)
    ref_bf = reference(x_bf, cos, sin, params_bf,
                       n_heads=n_heads, n_kv_heads=n_kv_heads, eps=eps)
    err_bf = jnp.max(jnp.abs(out_bf.astype(jnp.float32) - ref_bf))
    assert jnp.allclose(out_bf.astype(jnp.float32), ref_bf, atol=5e-2, rtol=5e-2), \
        f"bf16 max abs err {err_bf}"

    print("KERNEL_OK")
</pallas_src>

<mosaic_0001>
module attributes {stable_mosaic.version = 11 : i64} {
  func.func @_qkv_rope_kernel(%arg0: i32, %arg1: i32, %arg2: memref<1x8x32xf32, #tpu.memory_space<vmem>>, %arg3: memref<1x32xf32, #tpu.memory_space<vmem>>, %arg4: memref<32x32xf32, #tpu.memory_space<vmem>>, %arg5: memref<32x16xf32, #tpu.memory_space<vmem>>, %arg6: memref<32x16xf32, #tpu.memory_space<vmem>>, %arg7: memref<8x8xf32, #tpu.memory_space<vmem>>, %arg8: memref<8x8xf32, #tpu.memory_space<vmem>>, %arg9: memref<1x4x8x8xf32, #tpu.memory_space<vmem>>, %arg10: memref<1x2x8x8xf32, #tpu.memory_space<vmem>>, %arg11: memref<1x2x8x8xf32, #tpu.memory_space<vmem>>) attributes {dimension_semantics = [#tpu.dimension_semantics<parallel>, #tpu.dimension_semantics<parallel>], iteration_bounds = array<i64: 2, 1>, scalar_prefetch = 0 : i64, scratch_operands = 0 : i64, tpu.core_type = #tpu.core_type<tc>, window_params = [{transform_indices = @transform_0, window_bounds = array<i64: 1, 8, 32>}, {pipeline_mode = #tpu.pipeline_mode<synchronous>, transform_indices = @transform_1, window_bounds = array<i64: 1, 32>}, {pipeline_mode = #tpu.pipeline_mode<synchronous>, transform_indices = @transform_2, window_bounds = array<i64: 32, 32>}, {pipeline_mode = #tpu.pipeline_mode<synchronous>, transform_indices = @transform_3, window_bounds = array<i64: 32, 16>}, {pipeline_mode = #tpu.pipeline_mode<synchronous>, transform_indices = @transform_4, window_bounds = array<i64: 32, 16>}, {transform_indices = @transform_5, window_bounds = array<i64: 8, 8>}, {transform_indices = @transform_6, window_bounds = array<i64: 8, 8>}, {transform_indices = @transform_7, window_bounds = array<i64: 1, 4, 8, 8>}, {transform_indices = @transform_8, window_bounds = array<i64: 1, 2, 8, 8>}, {transform_indices = @transform_9, window_bounds = array<i64: 1, 2, 8, 8>}]} {
    %c0 = arith.constant 0 : index
    %c0_0 = arith.constant 0 : index
    %c0_1 = arith.constant 0 : index
    %0 = vector.load %arg2[%c0, %c0_0, %c0_1] : memref<1x8x32xf32, #tpu.memory_space<vmem>>, vector<1x8x32xf32>
    %1 = vector.shape_cast %0 : vector<1x8x32xf32> to vector<8x32xf32>
    %2 = arith.mulf %1, %1 : vector<8x32xf32>
    %cst = arith.constant dense<0.000000e+00> : vector<8xf32>
    %3 = vector.multi_reduction <add>, %2, %cst [1] : vector<8x32xf32> to vector<8xf32>
    %4 = vector.shape_cast %3 : vector<8xf32> to vector<8x1xf32>
    %cst_2 = arith.constant 3.200000e+01 : f32
    %5 = vector.broadcast %cst_2 : f32 to vector<8x1xf32>
    %6 = arith.divf %4, %5 : vector<8x1xf32>
    %c0_3 = arith.constant 0 : index
    %c0_4 = arith.constant 0 : index
    %7 = vector.load %arg3[%c0_3, %c0_4] : memref<1x32xf32, #tpu.memory_space<vmem>>, vector<1x32xf32>
    %cst_5 = arith.constant 9.99999997E-7 : f32
    %8 = vector.broadcast %cst_5 : f32 to vector<8x1xf32>
    %9 = arith.addf %6, %8 : vector<8x1xf32>
    %10 = math.rsqrt %9 : vector<8x1xf32>
    %11 = vector.broadcast %10 : vector<8x1xf32> to vector<8x32xf32>
    %12 = arith.mulf %1, %11 : vector<8x32xf32>
    %13 = vector.broadcast %7 : vector<1x32xf32> to vector<8x32xf32>
    %14 = arith.mulf %13, %12 : vector<8x32xf32>
    %c0_6 = arith.constant 0 : index
    %c0_7 = arith.constant 0 : index
    %15 = vector.load %arg4[%c0_6, %c0_7] : memref<32x32xf32, #tpu.memory_space<vmem>>, vector<32x32xf32>
    %cst_8 = arith.constant dense<0.000000e+00> : vector<8x32xf32>
    %16 = tpu.matmul %14, %15, %cst_8 {dimension_numbers = #tpu.dot_dimension_numbers<[1], [0], [0], [1], [0, 0, 1, 1], [], []>} : vector<8x32xf32>, vector<32x32xf32>, vector<8x32xf32> -> vector<8x32xf32>
    %c0_9 = arith.constant 0 : index
    %c0_10 = arith.constant 0 : index
    %17 = vector.load %arg5[%c0_9, %c0_10] : memref<32x16xf32, #tpu.memory_space<vmem>>, vector<32x16xf32>
    %cst_11 = arith.constant dense<0.000000e+00> : vector<8x16xf32>
    %18 = tpu.matmul %14, %17, %cst_11 {dimension_numbers = #tpu.dot_dimension_numbers<[1], [0], [0], [1], [0, 0, 1, 1], [], []>} : vector<8x32xf32>, vector<32x16xf32>, vector<8x16xf32> -> vector<8x16xf32>
    %c0_12 = arith.constant 0 : index
    %c0_13 = arith.constant 0 : index
    %19 = vector.load %arg6[%c0_12, %c0_13] : memref<32x16xf32, #tpu.memory_space<vmem>>, vector<32x16xf32>
    %cst_14 = arith.constant dense<0.000000e+00> : vector<8x16xf32>
    %20 = tpu.matmul %14, %19, %cst_14 {dimension_numbers = #tpu.dot_dimension_numbers<[1], [0], [0], [1], [0, 0, 1, 1], [], []>} : vector<8x32xf32>, vector<32x16xf32>, vector<8x16xf32> -> vector<8x16xf32>
    %c0_15 = arith.constant 0 : index
    %c0_16 = arith.constant 0 : index
    %21 = vector.load %arg7[%c0_15, %c0_16] : memref<8x8xf32, #tpu.memory_space<vmem>>, vector<8x8xf32>
    %c0_17 = arith.constant 0 : index
    %c0_18 = arith.constant 0 : index
    %22 = vector.load %arg8[%c0_17, %c0_18] : memref<8x8xf32, #tpu.memory_space<vmem>>, vector<8x8xf32>
    %23 = vector.extract_strided_slice %16 {offsets = [0, 0], sizes = [8, 8], strides = [1, 1]} : vector<8x32xf32> to vector<8x8xf32>
    %24 = arith.mulf %23, %21 : vector<8x8xf32>
    %25 = vector.extract_strided_slice %23 {offsets = [0, 4], sizes = [8, 4], strides = [1, 1]} : vector<8x8xf32> to vector<8x4xf32>
    %26 = vector.extract_strided_slice %23 {offsets = [0, 0], sizes = [8, 4], strides = [1, 1]} : vector<8x8xf32> to vector<8x4xf32>
    %27 = tpu.concatenate %25, %26 in 1 : vector<8x4xf32>, vector<8x4xf32> -> vector<8x8xf32>
    %28 = arith.mulf %27, %22 : vector<8x8xf32>
    %29 = arith.addf %24, %28 : vector<8x8xf32>
    %cst_19 = arith.constant 0.353553385 : f32
    %30 = vector.broadcast %cst_19 : f32 to vector<8x8xf32>
    %31 = arith.mulf %29, %30 : vector<8x8xf32>
    %c0_20 = arith.constant 0 : index
    %c0_21 = arith.constant 0 : index
    %c0_22 = arith.constant 0 : index
    %c0_23 = arith.constant 0 : index
    %32 = vector.load %arg9[%c0_20, %c0_21, %c0_22, %c0_23] : memref<1x4x8x8xf32, #tpu.memory_space<vmem>>, vector<1x1x8x8xf32>
    %33 = vector.shape_cast %32 : vector<1x1x8x8xf32> to vector<8x8xf32>
    %34 = vector.shape_cast %31 : vector<8x8xf32> to vector<1x1x8x8xf32>
    tpu.vector_store %arg9[%c0_20, %c0_21, %c0_22, %c0_23], %34 {strides = array<i32>} : memref<1x4x8x8xf32, #tpu.memory_space<vmem>>, vector<1x1x8x8xf32>,
    %35 = vector.extract_strided_slice %16 {offsets = [0, 8], sizes = [8, 8], strides = [1, 1]} : vector<8x32xf32> to vector<8x8xf32>
    %36 = arith.mulf %35, %21 : vector<8x8xf32>
    %37 = vector.extract_strided_slice %35 {offsets = [0, 4], sizes = [8, 4], strides = [1, 1]} : vector<8x8xf32> to vector<8x4xf32>
    %38 = vector.extract_strided_slice %35 {offsets = [0, 0], sizes = [8, 4], strides = [1, 1]} : vector<8x8xf32> to vector<8x4xf32>
    %39 = tpu.concatenate %37, %38 in 1 : vector<8x4xf32>, vector<8x4xf32> -> vector<8x8xf32>
    %40 = arith.mulf %39, %22 : vector<8x8xf32>
    %41 = arith.addf %36, %40 : vector<8x8xf32>
    %cst_24 = arith.constant 0.353553385 : f32
    %42 = vector.broadcast %cst_24 : f32 to vector<8x8xf32>
    %43 = arith.mulf %41, %42 : vector<8x8xf32>
    %c0_25 = arith.constant 0 : index
    %c1 = arith.constant 1 : index
    %c0_26 = arith.constant 0 : index
    %c0_27 = arith.constant 0 : index
    %44 = vector.load %arg9[%c0_25, %c1, %c0_26, %c0_27] : memref<1x4x8x8xf32, #tpu.memory_space<vmem>>, vector<1x1x8x8xf32>
    %45 = vector.shape_cast %44 : vector<1x1x8x8xf32> to vector<8x8xf32>
    %46 = vector.shape_cast %43 : vector<8x8xf32> to vector<1x1x8x8xf32>
    tpu.vector_store %arg9[%c0_25, %c1, %c0_26, %c0_27], %46 {strides = array<i32>} : memref<1x4x8x8xf32, #tpu.memory_space<vmem>>, vector<1x1x8x8xf32>,
    %47 = vector.extract_strided_slice %16 {offsets = [0, 16], sizes = [8, 8], strides = [1, 1]} : vector<8x32xf32> to vector<8x8xf32>
    %48 = arith.mulf %47, %21 : vector<8x8xf32>
    %49 = vector.extract_strided_slice %47 {offsets = [0, 4], sizes = [8, 4], strides = [1, 1]} : vector<8x8xf32> to vector<8x4xf32>
    %50 = vector.extract_strided_slice %47 {offsets = [0, 0], sizes = [8, 4], strides = [1, 1]} : vector<8x8xf32> to vector<8x4xf32>
    %51 = tpu.concatenate %49, %50 in 1 : vector<8x4xf32>, vector<8x4xf32> -> vector<8x8xf32>
    %52 = arith.mulf %51, %22 : vector<8x8xf32>
    %53 = arith.addf %48, %52 : vector<8x8xf32>
    %cst_28 = arith.constant 0.353553385 : f32
    %54 = vector.broadcast %cst_28 : f32 to vector<8x8xf32>
    %55 = arith.mulf %53, %54 : vector<8x8xf32>
    %c0_29 = arith.constant 0 : index
    %c2 = arith.constant 2 : index
    %c0_30 = arith.constant 0 : index
    %c0_31 = arith.constant 0 : index
    %56 = vector.load %arg9[%c0_29, %c2, %c0_30, %c0_31] : memref<1x4x8x8xf32, #tpu.memory_space<vmem>>, vector<1x1x8x8xf32>
    %57 = vector.shape_cast %56 : vector<1x1x8x8xf32> to vector<8x8xf32>
    %58 = vector.shape_cast %55 : vector<8x8xf32> to vector<1x1x8x8xf32>
    tpu.vector_store %arg9[%c0_29, %c2, %c0_30, %c0_31], %58 {strides = array<i32>} : memref<1x4x8x8xf32, #tpu.memory_space<vmem>>, vector<1x1x8x8xf32>,
    %59 = vector.extract_strided_slice %16 {offsets = [0, 24], sizes = [8, 8], strides = [1, 1]} : vector<8x32xf32> to vector<8x8xf32>
    %60 = arith.mulf %59, %21 : vector<8x8xf32>
    %61 = vector.extract_strided_slice %59 {offsets = [0, 4], sizes = [8, 4], strides = [1, 1]} : vector<8x8xf32> to vector<8x4xf32>
    %62 = vector.extract_strided_slice %59 {offsets = [0, 0], sizes = [8, 4], strides = [1, 1]} : vector<8x8xf32> to vector<8x4xf32>
    %63 = tpu.concatenate %61, %62 in 1 : vector<8x4xf32>, vector<8x4xf32> -> vector<8x8xf32>
    %64 = arith.mulf %63, %22 : vector<8x8xf32>
    %65 = arith.addf %60, %64 : vector<8x8xf32>
    %cst_32 = arith.constant 0.353553385 : f32
    %66 = vector.broadcast %cst_32 : f32 to vector<8x8xf32>
    %67 = arith.mulf %65, %66 : vector<8x8xf32>
    %c0_33 = arith.constant 0 : index
    %c3 = arith.constant 3 : index
    %c0_34 = arith.constant 0 : index
    %c0_35 = arith.constant 0 : index
    %68 = vector.load %arg9[%c0_33, %c3, %c0_34, %c0_35] : memref<1x4x8x8xf32, #tpu.memory_space<vmem>>, vector<1x1x8x8xf32>
    %69 = vector.shape_cast %68 : vector<1x1x8x8xf32> to vector<8x8xf32>
    %70 = vector.shape_cast %67 : vector<8x8xf32> to vector<1x1x8x8xf32>
    tpu.vector_store %arg9[%c0_33, %c3, %c0_34, %c0_35], %70 {strides = array<i32>} : memref<1x4x8x8xf32, #tpu.memory_space<vmem>>, vector<1x1x8x8xf32>,
    %71 = vector.extract_strided_slice %18 {offsets = [0, 0], sizes = [8, 8], strides = [1, 1]} : vector<8x16xf32> to vector<8x8xf32>
    %72 = arith.mulf %71, %21 : vector<8x8xf32>
    %73 = vector.extract_strided_slice %71 {offsets = [0, 4], sizes = [8, 4], strides = [1, 1]} : vector<8x8xf32> to vector<8x4xf32>
    %74 = vector.extract_strided_slice %71 {offsets = [0, 0], sizes = [8, 4], strides = [1, 1]} : vector<8x8xf32> to vector<8x4xf32>
    %75 = tpu.concatenate %73, %74 in 1 : vector<8x4xf32>, vector<8x4xf32> -> vector<8x8xf32>
    %76 = arith.mulf %75, %22 : vector<8x8xf32>
    %77 = arith.addf %72, %76 : vector<8x8xf32>
    %c0_36 = arith.constant 0 : index
    %c0_37 = arith.constant 0 : index
    %c0_38 = arith.constant 0 : index
    %c0_39 = arith.constant 0 : index
    %78 = vector.load %arg10[%c0_36, %c0_37, %c0_38, %c0_39] : memref<1x2x8x8xf32, #tpu.memory_space<vmem>>, vector<1x1x8x8xf32>
    %79 = vector.shape_cast %78 : vector<1x1x8x8xf32> to vector<8x8xf32>
    %80 = vector.shape_cast %77 : vector<8x8xf32> to vector<1x1x8x8xf32>
    tpu.vector_store %arg10[%c0_36, %c0_37, %c0_38, %c0_39], %80 {strides = array<i32>} : memref<1x2x8x8xf32, #tpu.memory_space<vmem>>, vector<1x1x8x8xf32>,
    %81 = vector.extract_strided_slice %20 {offsets = [0, 0], sizes = [8, 8], strides = [1, 1]} : vector<8x16xf32> to vector<8x8xf32>
    %c0_40 = arith.constant 0 : index
    %c0_41 = arith.constant 0 : index
    %c0_42 = arith.constant 0 : index
    %c0_43 = arith.constant 0 : index
    %82 = vector.load %arg11[%c0_40, %c0_41, %c0_42, %c0_43] : memref<1x2x8x8xf32, #tpu.memory_space<vmem>>, vector<1x1x8x8xf32>
    %83 = vector.shape_cast %82 : vector<1x1x8x8xf32> to vector<8x8xf32>
    %84 = vector.shape_cast %81 : vector<8x8xf32> to vector<1x1x8x8xf32>
    tpu.vector_store %arg11[%c0_40, %c0_41, %c0_42, %c0_43], %84 {strides = array<i32>} : memref<1x2x8x8xf32, #tpu.memory_space<vmem>>, vector<1x1x8x8xf32>,
    %85 = vector.extract_strided_slice %18 {offsets = [0, 8], sizes = [8, 8], strides = [1, 1]} : vector<8x16xf32> to vector<8x8xf32>
    %86 = arith.mulf %85, %21 : vector<8x8xf32>
    %87 = vector.extract_strided_slice %85 {offsets = [0, 4], sizes = [8, 4], strides = [1, 1]} : vector<8x8xf32> to vector<8x4xf32>
    %88 = vector.extract_strided_slice %85 {offsets = [0, 0], sizes = [8, 4], strides = [1, 1]} : vector<8x8xf32> to vector<8x4xf32>
    %89 = tpu.concatenate %87, %88 in 1 : vector<8x4xf32>, vector<8x4xf32> -> vector<8x8xf32>
    %90 = arith.mulf %89, %22 : vector<8x8xf32>
    %91 = arith.addf %86, %90 : vector<8x8xf32>
    %c0_44 = arith.constant 0 : index
    %c1_45 = arith.constant 1 : index
    %c0_46 = arith.constant 0 : index
    %c0_47 = arith.constant 0 : index
    %92 = vector.load %arg10[%c0_44, %c1_45, %c0_46, %c0_47] : memref<1x2x8x8xf32, #tpu.memory_space<vmem>>, vector<1x1x8x8xf32>
    %93 = vector.shape_cast %92 : vector<1x1x8x8xf32> to vector<8x8xf32>
    %94 = vector.shape_cast %91 : vector<8x8xf32> to vector<1x1x8x8xf32>
    tpu.vector_store %arg10[%c0_44, %c1_45, %c0_46, %c0_47], %94 {strides = array<i32>} : memref<1x2x8x8xf32, #tpu.memory_space<vmem>>, vector<1x1x8x8xf32>,
    %95 = vector.extract_strided_slice %20 {offsets = [0, 8], sizes = [8, 8], strides = [1, 1]} : vector<8x16xf32> to vector<8x8xf32>
    %c0_48 = arith.constant 0 : index
    %c1_49 = arith.constant 1 : index
    %c0_50 = arith.constant 0 : index
    %c0_51 = arith.constant 0 : index
    %96 = vector.load %arg11[%c0_48, %c1_49, %c0_50, %c0_51] : memref<1x2x8x8xf32, #tpu.memory_space<vmem>>, vector<1x1x8x8xf32>
    %97 = vector.shape_cast %96 : vector<1x1x8x8xf32> to vector<8x8xf32>
    %98 = vector.shape_cast %95 : vector<8x8xf32> to vector<1x1x8x8xf32>
    tpu.vector_store %arg11[%c0_48, %c1_49, %c0_50, %c0_51], %98 {strides = array<i32>} : memref<1x2x8x8xf32, #tpu.memory_space<vmem>>, vector<1x1x8x8xf32>,
    return
  }
  func.func @transform_0(%arg0: i32, %arg1: i32) -> (i32, i32, i32) {
    %c0_i32 = arith.constant 0 : i32
    %c0_i32_0 = arith.constant 0 : i32
    return %arg0, %arg1, %c0_i32 : i32, i32, i32
  }
  func.func @transform_1(%arg0: i32, %arg1: i32) -> (i32, i32) {
    %c0_i32 = arith.constant 0 : i32
    %c0_i32_0 = arith.constant 0 : i32
    %c0_i32_1 = arith.constant 0 : i32
    return %c0_i32, %c0_i32_0 : i32, i32
  }
  func.func @transform_2(%arg0: i32, %arg1: i32) -> (i32, i32) {
    %c0_i32 = arith.constant 0 : i32
    %c0_i32_0 = arith.constant 0 : i32
    %c0_i32_1 = arith.constant 0 : i32
    return %c0_i32, %c0_i32_0 : i32, i32
  }
  func.func @transform_3(%arg0: i32, %arg1: i32) -> (i32, i32) {
    %c0_i32 = arith.constant 0 : i32
    %c0_i32_0 = arith.constant 0 : i32
    %c0_i32_1 = arith.constant 0 : i32
    return %c0_i32, %c0_i32_0 : i32, i32
  }
  func.func @transform_4(%arg0: i32, %arg1: i32) -> (i32, i32) {
    %c0_i32 = arith.constant 0 : i32
    %c0_i32_0 = arith.constant 0 : i32
    %c0_i32_1 = arith.constant 0 : i32
    return %c0_i32, %c0_i32_0 : i32, i32
  }
  func.func @transform_5(%arg0: i32, %arg1: i32) -> (i32, i32) {
    %c0_i32 = arith.constant 0 : i32
    %c0_i32_0 = arith.constant 0 : i32
    return %arg1, %c0_i32 : i32, i32
  }
  func.func @transform_6(%arg0: i32, %arg1: i32) -> (i32, i32) {
    %c0_i32 = arith.constant 0 : i32
    %c0_i32_0 = arith.constant 0 : i32
    return %arg1, %c0_i32 : i32, i32
  }
  func.func @transform_7(%arg0: i32, %arg1: i32) -> (i32, i32, i32, i32) {
    %c0_i32 = arith.constant 0 : i32
    %c0_i32_0 = arith.constant 0 : i32
    %c0_i32_1 = arith.constant 0 : i32
    return %arg0, %c0_i32, %arg1, %c0_i32_0 : i32, i32, i32, i32
  }
  func.func @transform_8(%arg0: i32, %arg1: i32) -> (i32, i32, i32, i32) {
    %c0_i32 = arith.constant 0 : i32
    %c0_i32_0 = arith.constant 0 : i32
    %c0_i32_1 = arith.constant 0 : i32
    return %arg0, %c0_i32, %arg1, %c0_i32_0 : i32, i32, i32, i32
  }
  func.func @transform_9(%arg0: i32, %arg1: i32) -> (i32, i32, i32, i32) {
    %c0_i32 = arith.constant 0 : i32
    %c0_i32_0 = arith.constant 0 : i32
    %c0_i32_1 = arith.constant 0 : i32
    return %arg0, %c0_i32, %arg1, %c0_i32_0 : i32, i32, i32, i32
  }
}

</mosaic_0001>

<llo_original>
// kernel: tpu_custom_call.1
$region0: #{tpu_custom_call.1}
  #allocation0 [shape = 'u32[]', space=smem, size = 0x4, offset = 0x4, fixed_abs, tag = 'smem constant byte address 0x4 - core index']
  #allocation1 [shape = 'u32[72,128]{1,0:T(1,128)}', space=vmem, size = 0x9000, scoped, tag = 'internal scratch']
  %s0 = inlined_call_operand.vmem [shape: f32[2,8,32], index: 0, kind: input, shape index: {}]
  %s1 = inlined_call_operand.vmem [shape: f32[1,32], index: 1, kind: input, shape index: {}]
  %s2 = inlined_call_operand.vmem [shape: f32[32,32], index: 2, kind: input, shape index: {}]
  %s3 = inlined_call_operand.vmem [shape: f32[32,16], index: 3, kind: input, shape index: {}]
  %s4 = inlined_call_operand.vmem [shape: f32[32,16], index: 4, kind: input, shape index: {}]
  %s5 = inlined_call_operand.vmem [shape: f32[8,8], index: 5, kind: input, shape index: {}]
  %s6 = inlined_call_operand.vmem [shape: f32[8,8], index: 6, kind: input, shape index: {}]
  %s7 = inlined_call_operand.hbm [shape: f32[2,4,8,8], index: 7, kind: output, shape index: {0}]
  %s8 = inlined_call_operand.hbm [shape: f32[2,2,8,8], index: 8, kind: output, shape index: {1}]
  %s9 = inlined_call_operand.hbm [shape: f32[2,2,8,8], index: 9, kind: output, shape index: {2}]
  %10 = xla_tuple %s7, %s8, %s9
  %s11 = sld [smem:[#allocation0]]
  $region77: #{tpu_custom_call.1} parent=0
    _
  %s13 = ssub.s32 1, %s11
  %s14 = scalar_select 0, %s13, %s11
  $region1: #{tpu_custom_call.1} parent=0
    #allocation2 [shape = 'u8[32768]{0}', space=vmem, size = 0x8000, scoped, tag = 'output window, operand 0']
    #allocation3 [shape = 's32[2]{0}', space=sflag, size = 0x8, scoped, tag = 'scoped memory for tpu_custom_call.1']
    #allocation4 [shape = 'u8[16384]{0}', space=vmem, size = 0x4000, scoped, tag = 'output window, operand 1']
    #allocation5 [shape = 's32[2]{0}', space=sflag, size = 0x8, scoped, tag = 'scoped memory for tpu_custom_call.1']
    #allocation6 [shape = 'u8[16384]{0}', space=vmem, size = 0x4000, scoped, tag = 'output window, operand 2']
    %15 = vsyncpa [#allocation3], 0
    %s16 = scalar_lea.sflag [#allocation3], 1
    %17 = vsyncpa %s16, 0
    %18 = vsyncpa [#allocation5], 0
    %s19 = scalar_lea.sflag [#allocation5], 1
    %20 = vsyncpa %s19, 0
    loop: start=0, step=1, limit=4
    $region2: #{tpu_custom_call.1} parent=1 // loop_pre_header
      _
    $region3: #{tpu_custom_call.1} parent=1 // loop_header
      %s22 = sphi 0, %s26
      %p23 = scmp.ge.s32.totalorder %s22, 4
      %s29 = sphi 0, %s41
      %s30 = sphi 0, %s37
      %s31 = sphi 0, %s29
      %s32 = sphi 0, %s30
      %s33 = sphi 0, %s31
      %s34 = sphi 0, %s32
      %s46 = sphi 0, %s48
      %s49 = sphi 0, %s46
      %s50 = sphi 0, %s49
      %s66 = sphi 0, %s50
      %s70 = sphi 0, %s70
      %s72 = sphi 0, %s70
      %s73 = sphi 0, %s72
      %s87 = sphi 0, %s73
      %s91 = sphi 0, %s91
      %s93 = sphi 0, %s91
      %s94 = sphi 0, %s93
      %s108 = sphi 0, %s94
      %s112 = sphi 0, %s112
      %s114 = sphi 0, %s112
      %s115 = sphi 0, %s114
      %s129 = sphi 0, %s115
      %s133 = sphi 0, %s133
      %s135 = sphi 0, %s133
      %s136 = sphi 0, %s135
      %s150 = sphi 0, %s136
      %s156 = sphi 0, %s158
      %s159 = sphi 0, %s156
      %s160 = sphi 0, %s159
      %s176 = sphi 0, %s160
      %s182 = sphi 0, %s184
      %s185 = sphi 0, %s182
      %s186 = sphi 0, %s185
      %s202 = sphi 0, %s186
      %s210 = sphi 0, %s212
      %s213 = sphi 0, %s210
      %s214 = sphi 0, %s213
      %s230 = sphi 0, %s214
      %s238 = sphi 0, %s240
      %s241 = sphi 0, %s238
      %s242 = sphi 0, %s241
      %s258 = sphi 0, %s242
      %s266 = sphi 0, %s268
      %s269 = sphi 0, %s266
      %s270 = sphi 0, %s269
      %s286 = sphi 0, %s270
    $region4: #{tpu_custom_call.1} parent=1 // loop_header_branch
      %25 = sbr.rel (%p23) target = $region8
    $region5: #{tpu_custom_call.1} parent=1 // loop_body
      %s27 = ssub.s32 %s22, 1
      %s28 = ssub.s32 %s22, 2
      %s35 = sadd.s32 1, %s30
      %p36 = scmp.ge.s32.totalorder %s35, 1
      %s37 = scalar_select %p36, 0, %s35
      %s38 = sadd.s32 1, %s29
      %s39 = scalar_select %p36, %s38, %s29
      %p40 = scmp.ge.s32.totalorder %s39, 2
      %s41 = scalar_select %p40, 0, %s39
      %s42 = ssub.s32 %s29, %s41
      %s43 = ssub.s32 %s30, %s37
      %s44 = sor.u32 %s42, %s43
      %p45 = scmp.eq.s32.totalorder %s44, 0
      %s47 = sadd.s32 %s46, 1
      %s48 = scalar_select %p45, %s46, %s47
      %p51 = pneg %p45
      %p52 = scmp.eq.s32.totalorder %s22, 1
      %p53 = por %p51, %p52
      %p54 = scmp.ne.s32.totalorder %s46, %s49
      %p55 = scmp.eq.s32.totalorder %s22, 0
      %p56 = por %p54, %p55
      %p57 = scmp.ne.s32.totalorder %s46, %s49
      %p58 = scmp.eq.s32.totalorder %s27, 1
      %p59 = por %p57, %p58
      %p60 = scmp.ne.s32.totalorder %s49, %s50
      %p61 = scmp.eq.s32.totalorder %s27, 0
      %p62 = por %p60, %p61
      %p63 = scmp.ne.s32.totalorder %s49, %s50
      %p64 = scmp.eq.s32.totalorder %s28, 1
      %p65 = por %p63, %p64
      %p67 = scmp.ne.s32.totalorder %s50, %s66
      %p68 = scmp.eq.s32.totalorder %s28, 0
      %p69 = por %p67, %p68
      %s71 = sadd.s32 %s70, 1
      %p74 = scmp.eq.s32.totalorder %s22, 1
      %p75 = scmp.ne.s32.totalorder %s70, %s72
      %p76 = scmp.eq.s32.totalorder %s22, 0
      %p77 = por %p75, %p76
      %p78 = scmp.ne.s32.totalorder %s70, %s72
      %p79 = scmp.eq.s32.totalorder %s27, 1
      %p80 = por %p78, %p79
      %p81 = scmp.ne.s32.totalorder %s72, %s73
      %p82 = scmp.eq.s32.totalorder %s27, 0
      %p83 = por %p81, %p82
      %p84 = scmp.ne.s32.totalorder %s72, %s73
      %p85 = scmp.eq.s32.totalorder %s28, 1
      %p86 = por %p84, %p85
      %p88 = scmp.ne.s32.totalorder %s73, %s87
      %p89 = scmp.eq.s32.totalorder %s28, 0
      %p90 = por %p88, %p89
      %s92 = sadd.s32 %s91, 1
      %p95 = scmp.eq.s32.totalorder %s22, 1
      %p96 = scmp.ne.s32.totalorder %s91, %s93
      %p97 = scmp.eq.s32.totalorder %s22, 0
      %p98 = por %p96, %p97
      %p99 = scmp.ne.s32.totalorder %s91, %s93
      %p100 = scmp.eq.s32.totalorder %s27, 1
      %p101 = por %p99, %p100
      %p102 = scmp.ne.s32.totalorder %s93, %s94
      %p103 = scmp.eq.s32.totalorder %s27, 0
      %p104 = por %p102, %p103
      %p105 = scmp.ne.s32.totalorder %s93, %s94
      %p106 = scmp.eq.s32.totalorder %s28, 1
      %p107 = por %p105, %p106
      %p109 = scmp.ne.s32.totalorder %s94, %s108
      %p110 = scmp.eq.s32.totalorder %s28, 0
      %p111 = por %p109, %p110
      %s113 = sadd.s32 %s112, 1
      %p116 = scmp.eq.s32.totalorder %s22, 1
      %p117 = scmp.ne.s32.totalorder %s112, %s114
      %p118 = scmp.eq.s32.totalorder %s22, 0
      %p119 = por %p117, %p118
      %p120 = scmp.ne.s32.totalorder %s112, %s114
      %p121 = scmp.eq.s32.totalorder %s27, 1
      %p122 = por %p120, %p121
      %p123 = scmp.ne.s32.totalorder %s114, %s115
      %p124 = scmp.eq.s32.totalorder %s27, 0
      %p125 = por %p123, %p124
      %p126 = scmp.ne.s32.totalorder %s114, %s115
      %p127 = scmp.eq.s32.totalorder %s28, 1
      %p128 = por %p126, %p127
      %p130 = scmp.ne.s32.totalorder %s115, %s129
      %p131 = scmp.eq.s32.totalorder %s28, 0
      %p132 = por %p130, %p131
      %s134 = sadd.s32 %s133, 1
      %p137 = scmp.eq.s32.totalorder %s22, 1
      %p138 = scmp.ne.s32.totalorder %s133, %s135
      %p139 = scmp.eq.s32.totalorder %s22, 0
      %p140 = por %p138, %p139
      %p141 = scmp.ne.s32.totalorder %s133, %s135
      %p142 = scmp.eq.s32.totalorder %s27, 1
      %p143 = por %p141, %p142
      %p144 = scmp.ne.s32.totalorder %s135, %s136
      %p145 = scmp.eq.s32.totalorder %s27, 0
      %p146 = por %p144, %p145
      %p147 = scmp.ne.s32.totalorder %s135, %s136
      %p148 = scmp.eq.s32.totalorder %s28, 1
      %p149 = por %p147, %p148
      %p151 = scmp.ne.s32.totalorder %s136, %s150
      %p152 = scmp.eq.s32.totalorder %s28, 0
      %p153 = por %p151, %p152
      %s154 = ssub.s32 %s30, %s37
      %p155 = scmp.eq.s32.totalorder %s154, 0
      %s157 = sadd.s32 %s156, 1
      %s158 = scalar_select %p155, %s156, %s157
      %p161 = pneg %p155
      %p162 = scmp.eq.s32.totalorder %s22, 1
      %p163 = por %p161, %p162
      %p164 = scmp.ne.s32.totalorder %s156, %s159
      %p165 = scmp.eq.s32.totalorder %s22, 0
      %p166 = por %p164, %p165
      %p167 = scmp.ne.s32.totalorder %s156, %s159
      %p168 = scmp.eq.s32.totalorder %s27, 1
      %p169 = por %p167, %p168
      %p170 = scmp.ne.s32.totalorder %s159, %s160
      %p171 = scmp.eq.s32.totalorder %s27, 0
      %p172 = por %p170, %p171
      %p173 = scmp.ne.s32.totalorder %s159, %s160
      %p174 = scmp.eq.s32.totalorder %s28, 1
      %p175 = por %p173, %p174
      %p177 = scmp.ne.s32.totalorder %s160, %s176
      %p178 = scmp.eq.s32.totalorder %s28, 0
      %p179 = por %p177, %p178
      %s180 = ssub.s32 %s30, %s37
      %p181 = scmp.eq.s32.totalorder %s180, 0
      %s183 = sadd.s32 %s182, 1
      %s184 = scalar_select %p181, %s182, %s183
      %p187 = pneg %p181
      %p188 = scmp.eq.s32.totalorder %s22, 1
      %p189 = por %p187, %p188
      %p190 = scmp.ne.s32.totalorder %s182, %s185
      %p191 = scmp.eq.s32.totalorder %s22, 0
      %p192 = por %p190, %p191
      %p193 = scmp.ne.s32.totalorder %s182, %s185
      %p194 = scmp.eq.s32.totalorder %s27, 1
      %p195 = por %p193, %p194
      %p196 = scmp.ne.s32.totalorder %s185, %s186
      %p197 = scmp.eq.s32.totalorder %s27, 0
      %p198 = por %p196, %p197
      %p199 = scmp.ne.s32.totalorder %s185, %s186
      %p200 = scmp.eq.s32.totalorder %s28, 1
      %p201 = por %p199, %p200
      %p203 = scmp.ne.s32.totalorder %s186, %s202
      %p204 = scmp.eq.s32.totalorder %s28, 0
      %p205 = por %p203, %p204
      %s206 = ssub.s32 %s29, %s41
      %s207 = ssub.s32 %s30, %s37
      %s208 = sor.u32 %s206, %s207
      %p209 = scmp.eq.s32.totalorder %s208, 0
      %s211 = sadd.s32 %s210, 1
      %s212 = scalar_select %p209, %s210, %s211
      %p215 = pneg %p209
      %p216 = scmp.eq.s32.totalorder %s22, 1
      %p217 = por %p215, %p216
      %p218 = scmp.ne.s32.totalorder %s210, %s213
      %p219 = scmp.eq.s32.totalorder %s22, 0
      %p220 = por %p218, %p219
      %p221 = scmp.ne.s32.totalorder %s210, %s213
      %p222 = scmp.eq.s32.totalorder %s27, 1
      %p223 = por %p221, %p222
      %p224 = scmp.ne.s32.totalorder %s213, %s214
      %p225 = scmp.eq.s32.totalorder %s27, 0
      %p226 = por %p224, %p225
      %p227 = scmp.ne.s32.totalorder %s213, %s214
      %p228 = scmp.eq.s32.totalorder %s28, 1
      %p229 = por %p227, %p228
      %p231 = scmp.ne.s32.totalorder %s214, %s230
      %p232 = scmp.eq.s32.totalorder %s28, 0
      %p233 = por %p231, %p232
      %s234 = ssub.s32 %s29, %s41
      %s235 = ssub.s32 %s30, %s37
      %s236 = sor.u32 %s234, %s235
      %p237 = scmp.eq.s32.totalorder %s236, 0
      %s239 = sadd.s32 %s238, 1
      %s240 = scalar_select %p237, %s238, %s239
      %p243 = pneg %p237
      %p244 = scmp.eq.s32.totalorder %s22, 1
      %p245 = por %p243, %p244
      %p246 = scmp.ne.s32.totalorder %s238, %s241
      %p247 = scmp.eq.s32.totalorder %s22, 0
      %p248 = por %p246, %p247
      %p249 = scmp.ne.s32.totalorder %s238, %s241
      %p250 = scmp.eq.s32.totalorder %s27, 1
      %p251 = por %p249, %p250
      %p252 = scmp.ne.s32.totalorder %s241, %s242
      %p253 = scmp.eq.s32.totalorder %s27, 0
      %p254 = por %p252, %p253
      %p255 = scmp.ne.s32.totalorder %s241, %s242
      %p256 = scmp.eq.s32.totalorder %s28, 1
      %p257 = por %p255, %p256
      %p259 = scmp.ne.s32.totalorder %s242, %s258
      %p260 = scmp.eq.s32.totalorder %s28, 0
      %p261 = por %p259, %p260
      %s262 = ssub.s32 %s29, %s41
      %s263 = ssub.s32 %s30, %s37
      %s264 = sor.u32 %s262, %s263
      %p265 = scmp.eq.s32.totalorder %s264, 0
      %s267 = sadd.s32 %s266, 1
      %s268 = scalar_select %p265, %s266, %s267
      %p271 = pneg %p265
      %p272 = scmp.eq.s32.totalorder %s22, 1
      %p273 = por %p271, %p272
      %p274 = scmp.ne.s32.totalorder %s266, %s269
      %p275 = scmp.eq.s32.totalorder %s22, 0
      %p276 = por %p274, %p275
      %p277 = scmp.ne.s32.totalorder %s266, %s269
      %p278 = scmp.eq.s32.totalorder %s27, 1
      %p279 = por %p277, %p278
      %p280 = scmp.ne.s32.totalorder %s269, %s270
      %p281 = scmp.eq.s32.totalorder %s27, 0
      %p282 = por %p280, %p281
      %p283 = scmp.ne.s32.totalorder %s269, %s270
      %p284 = scmp.eq.s32.totalorder %s28, 1
      %p285 = por %p283, %p284
      %p287 = scmp.ne.s32.totalorder %s270, %s286
      %p288 = scmp.eq.s32.totalorder %s28, 0
      %p289 = por %p287, %p288
      %p290 = scmp.le.s32.totalorder 1, %s22
      %p291 = scmp.lt.s32.totalorder %s22, 3
      %p292 = pnand %p290, %p291
      %p293 = pneg %p292
      // Predicated region
      $region9: #{tpu_custom_call.1} parent=5 // pred_check
        _
      $region10: #{tpu_custom_call.1} parent=5 // pred_check_branch
        %295 = sbr.rel (%p292) target = $region12
      $region11: #{tpu_custom_call.1} parent=5 // pred_region
        %s296 = ssub.s32 %s22, 1
        // Predicated region
        $region13: #{tpu_custom_call.1} parent=11 // pred_check
          %p297 = pneg %p83
        $region14: #{tpu_custom_call.1} parent=11 // pred_check_branch
          %299 = sbr.rel (%p297) target = $region16
        $region15: #{tpu_custom_call.1} parent=11 // pred_region
          _
        $region16: #{tpu_custom_call.1} parent=11 // pred_fallthru
          _
        // Predicated region
        $region17: #{tpu_custom_call.1} parent=11 // pred_check
          %p300 = pneg %p104
        $region18: #{tpu_custom_call.1} parent=11 // pred_check_branch
          %302 = sbr.rel (%p300) target = $region20
        $region19: #{tpu_custom_call.1} parent=11 // pred_region
          _
        $region20: #{tpu_custom_call.1} parent=11 // pred_fallthru
          _
        // Predicated region
        $region21: #{tpu_custom_call.1} parent=11 // pred_check
          %p303 = pneg %p125
        $region22: #{tpu_custom_call.1} parent=11 // pred_check_branch
          %305 = sbr.rel (%p303) target = $region24
        $region23: #{tpu_custom_call.1} parent=11 // pred_region
          _
        $region24: #{tpu_custom_call.1} parent=11 // pred_fallthru
          _
        // Predicated region
        $region25: #{tpu_custom_call.1} parent=11 // pred_check
          %p306 = pneg %p146
        $region26: #{tpu_custom_call.1} parent=11 // pred_check_branch
          %308 = sbr.rel (%p306) target = $region28
        $region27: #{tpu_custom_call.1} parent=11 // pred_region
          _
        $region28: #{tpu_custom_call.1} parent=11 // pred_fallthru
          _
        // Predicated region
        $region29: #{tpu_custom_call.1} parent=11 // pred_check
          %p309 = pneg %p172
        $region30: #{tpu_custom_call.1} parent=11 // pred_check_branch
          %311 = sbr.rel (%p309) target = $region32
        $region31: #{tpu_custom_call.1} parent=11 // pred_region
          %p312 = scmp.lt.s32.totalorder %s32, 0
          %s313 = scalar_select %p312, %s32, 0
          %s314 = smul.addr %s313, 8
          %s315 = scalar_lea.vmem %s5, %s314
        $region32: #{tpu_custom_call.1} parent=11 // pred_fallthru
          _
        // Predicated region
        $region33: #{tpu_custom_call.1} parent=11 // pred_check
          %p316 = pneg %p198
        $region34: #{tpu_custom_call.1} parent=11 // pred_check_branch
          %318 = sbr.rel (%p316) target = $region36
        $region35: #{tpu_custom_call.1} parent=11 // pred_region
          %p319 = scmp.lt.s32.totalorder %s32, 0
          %s320 = scalar_select %p319, %s32, 0
          %s321 = smul.addr %s320, 8
          %s322 = scalar_lea.vmem %s6, %s321
        $region36: #{tpu_custom_call.1} parent=11 // pred_fallthru
          _
      $region12: #{tpu_custom_call.1} parent=5 // pred_fallthru
        _
      %p323 = scmp.lt.s32.totalorder %s22, 2
      // Predicated region
      $region37: #{tpu_custom_call.1} parent=5 // pred_check
        %p324 = pneg %p323
      $region38: #{tpu_custom_call.1} parent=5 // pred_check_branch
        %326 = sbr.rel (%p324) target = $region40
      $region39: #{tpu_custom_call.1} parent=5 // pred_region
        // Predicated region
        $region41: #{tpu_custom_call.1} parent=39 // pred_check
          %p327 = pneg %p56
        $region42: #{tpu_custom_call.1} parent=39 // pred_check_branch
          %329 = sbr.rel (%p327) target = $region44
        $region43: #{tpu_custom_call.1} parent=39 // pred_region
          %p330 = scmp.lt.s32.totalorder %s29, 1
          %s331 = scalar_select %p330, %s29, 1
          %p332 = scmp.lt.s32.totalorder %s30, 0
          %s333 = scalar_select %p332, %s30, 0
          %s334 = sadd.s32 %s333, %s331
          %s335 = smul.addr %s334, 8
          %s336 = scalar_lea.vmem %s0, %s335
        $region44: #{tpu_custom_call.1} parent=39 // pred_fallthru
          _
      $region40: #{tpu_custom_call.1} parent=5 // pred_fallthru
        _
      %p337 = scmp.le.s32.totalorder 1, %s22
      %p338 = scmp.lt.s32.totalorder %s22, 3
      %p339 = pnand %p337, %p338
      %p340 = pneg %p339
      // Predicated region
      $region45: #{tpu_custom_call.1} parent=5 // pred_check
        _
      $region46: #{tpu_custom_call.1} parent=5 // pred_check_branch
        %342 = sbr.rel (%p339) target = $region48
      $region47: #{tpu_custom_call.1} parent=5 // pred_region
        %s343 = ssub.s32 %s22, 1
        %p344 = scmp.lt.s32.totalorder %s31, 1
        %s345 = scalar_select %p344, %s31, 1
        %p346 = scmp.lt.s32.totalorder %s32, 0
        %s347 = scalar_select %p346, %s32, 0
        %s348 = sadd.s32 %s347, %s345
        %s349 = smul.addr %s348, 8
        %s350 = scalar_lea.vmem %s0, %s349
        %p351 = pneg %p62
        %p352 = pneg %p59
        %p353 = pneg %p83
        %p354 = pneg %p80
        %p355 = pneg %p104
        %p356 = pneg %p101
        %p357 = pneg %p125
        %p358 = pneg %p122
        %p359 = pneg %p146
        %p360 = pneg %p143
        %p361 = scmp.lt.s32.totalorder %s32, 0
        %s362 = scalar_select %p361, %s32, 0
        %s363 = smul.addr %s362, 8
        %s364 = scalar_lea.vmem %s5, %s363
        %p365 = pneg %p172
        %p366 = pneg %p169
        %p367 = scmp.lt.s32.totalorder %s32, 0
        %s368 = scalar_select %p367, %s32, 0
        %s369 = smul.addr %s368, 8
        %s370 = scalar_lea.vmem %s6, %s369
        %p371 = pneg %p198
        %p372 = pneg %p195
        %p373 = pneg %p226
        %p374 = pneg %p223
        %s375 = sand.u32 %s213, 1
        %s376 = scalar_lea.sflag [#allocation3], %s375
        %s377 = sand.u32 %s213, 1
        %s378 = smul.addr %s377, 32
        %s379 = scalar_lea.vmem [#allocation2], %s378
        %p380 = pneg %p254
        %p381 = pneg %p251
        %s382 = sand.u32 %s27, 1
        %s383 = scalar_lea.sflag [#allocation5], %s382
        %s384 = sand.u32 %s241, 1
        %s385 = smul.addr %s384, 16
        %s386 = scalar_lea.vmem [#allocation4], %s385
        %p387 = pneg %p282
        %p388 = pneg %p279
        %s389 = sand.u32 %s27, 1
        %s390 = scalar_lea.sflag [#allocation5], %s389
        %s391 = sand.u32 %s269, 1
        %s392 = smul.addr %s391, 16
        %s393 = scalar_lea.vmem [#allocation6], %s392
        %p394 = scmp.lt.s32.totalorder %s31, 1
        %s395 = scalar_select %p394, %s31, 1
        %p396 = scmp.lt.s32.totalorder %s32, 0
        %s397 = scalar_select %p396, %s32, 0
        %s398 = sadd.s32 %s397, %s395
        %s399 = smul.addr %s398, 8
        %s400 = scalar_lea.vmem %s0, %s399
        %p401 = scmp.lt.s32.totalorder %s32, 0
        %s402 = scalar_select %p401, %s32, 0
        %s403 = smul.addr %s402, 8
        %s404 = scalar_lea.vmem %s5, %s403
        %p405 = scmp.lt.s32.totalorder %s32, 0
        %s406 = scalar_select %p405, %s32, 0
        %s407 = smul.addr %s406, 8
        %s408 = scalar_lea.vmem %s6, %s407
        %v409 = vld [vmem:[%s400] sm:$0xff]
        %v410 = vmul.f32 %v409, %v409
        %vm411 = vcmask 261120
        %v412 = vsel %vm411, %v410, 0.0
        %413 = vadd.xlane.f32.xlu0 %v412
        %v414 = vpop.xlane.xlu0 %413
        %v415 = vrcp.pop 32.0
        %v416 = vmul.f32 32.0, %v415
        %v417 = vsub.f32 1.0, %v416
        %v418 = vmul.f32 %v415, %v417
        %v419 = vadd.f32 %v415, %v418
        %vm420 = vweird.f32 %v415
        %v421 = vsel %vm420, %v415, %v419
        %v422 = vmul.f32 %v414, %v421
        %v423 = vld [vmem:[%s1] sm:$0x1]
        %v424 = vadd.f32 %v422, 1e-06
        %v425 = vrsqrt.pop %v424
        %v426 = vmul.f32 %v425, %v424
        %v427 = vmul.f32 %v426, %v425
        %v428 = vmul.f32 0.5, %v427
        %v429 = vsub.f32 1.5, %v428
        %v430 = vmul.f32 %v425, %v429
        %vm431 = vweird.f32 %v424
        %vm432 = vweird.f32 %v425
        %vm433 = vmor %vm431, %vm432
        %v434 = vsel %vm433, %v425, %v430
        %v435 = vmul.f32 %v409, %v434
        %v437 = vperm.slane %v423, 0
        %v439 = vmul.f32 %v437, %v435
        %v440 = vld [vmem:[%s2] sm:$0xff]
        %v441 = vld [vmem:[%s2 + $0x8] sm:$0xff]
        %v442 = vld [vmem:[%s2 + $0x10] sm:$0xff]
        %v443 = vld [vmem:[%s2 + $0x18] sm:$0xff]
        %v445 = vsel %vm411, %v439, 0
        %447 = vmatpush.msra.mxu0 0.0
        %448 = vmatpush.msra.mxu0 0.0
        %449 = vmatpush.msra.mxu0 0.0
        %450 = vmatpush.msra.mxu0 0.0
        %451 = vmatpush.msra.mxu0 0.0
        %452 = vmatpush.msra.mxu0 0.0
        %453 = vmatpush.msra.mxu0 0.0
        %454 = vmatpush.msra.mxu0 0.0
        %455 = vmatpush.msra.mxu0 0.0
        %456 = vmatpush.msra.mxu0 0.0
        %457 = vmatpush.msra.mxu0 0.0
        %458 = vmatpush.msra.mxu0 0.0
        %459 = vmatpush.msra.mxu0 %v443
        %460 = vmatpush.msra.mxu0 %v442
        %461 = vmatpush.msra.mxu0 %v441
        %462 = vmatpush.msra.mxu0 %v440
        %463 = vmatmul.f32.gmra.mxu0 %v445
        %v464 = vpop.f32.mrf.mxu0
        %v465 = vadd.f32 0.0, %v464
        %466 = vdwg.mxu0
        %v467 = vld [vmem:[%s3] sm:$0xff]
        %v468 = vld [vmem:[%s3 + $0x8] sm:$0xff]
        %v469 = vld [vmem:[%s3 + $0x10] sm:$0xff]
        %v470 = vld [vmem:[%s3 + $0x18] sm:$0xff]
        %471 = vmatpush.msra.mxu0 0.0
        %472 = vmatpush.msra.mxu0 0.0
        %473 = vmatpush.msra.mxu0 0.0
        %474 = vmatpush.msra.mxu0 0.0
        %475 = vmatpush.msra.mxu0 0.0
        %476 = vmatpush.msra.mxu0 0.0
        %477 = vmatpush.msra.mxu0 0.0
        %478 = vmatpush.msra.mxu0 0.0
        %479 = vmatpush.msra.mxu0 0.0
        %480 = vmatpush.msra.mxu0 0.0
        %481 = vmatpush.msra.mxu0 0.0
        %482 = vmatpush.msra.mxu0 0.0
        %483 = vmatpush.msra.mxu0 %v470
        %484 = vmatpush.msra.mxu0 %v469
        %485 = vmatpush.msra.mxu0 %v468
        %486 = vmatpush.msra.mxu0 %v467
        %487 = vmatmul.f32.gmra.mxu0 %v445
        %v488 = vpop.f32.mrf.mxu0
        %v489 = vadd.f32 0.0, %v488
        %490 = vdwg.mxu0
        %v491 = vld [vmem:[%s4] sm:$0xff]
        %v492 = vld [vmem:[%s4 + $0x8] sm:$0xff]
        %v493 = vld [vmem:[%s4 + $0x10] sm:$0xff]
        %v494 = vld [vmem:[%s4 + $0x18] sm:$0xff]
        %495 = vmatpush.msra.mxu0 0.0
        %496 = vmatpush.msra.mxu0 0.0
        %497 = vmatpush.msra.mxu0 0.0
        %498 = vmatpush.msra.mxu0 0.0
        %499 = vmatpush.msra.mxu0 0.0
        %500 = vmatpush.msra.mxu0 0.0
        %501 = vmatpush.msra.mxu0 0.0
        %502 = vmatpush.msra.mxu0 0.0
        %503 = vmatpush.msra.mxu0 0.0
        %504 = vmatpush.msra.mxu0 0.0
        %505 = vmatpush.msra.mxu0 0.0
        %506 = vmatpush.msra.mxu0 0.0
        %507 = vmatpush.msra.mxu0 %v494
        %508 = vmatpush.msra.mxu0 %v493
        %509 = vmatpush.msra.mxu0 %v492
        %510 = vmatpush.msra.mxu0 %v491
        %511 = vmatmul.f32.gmra.mxu0 %v445
        %v512 = vpop.f32.mrf.mxu0
        %v513 = vadd.f32 0.0, %v512
        %514 = vdwg.mxu0
        %v515 = vld [vmem:[%s404] sm:$0xff]
        %v516 = vld [vmem:[%s408] sm:$0xff]
        %v517 = vmul.f32 %v465, %v515
        %519 = vrot.lane.b32.xlu0 %v465, 124
        %v520 = vpop.permute.xlu0 %519
        %522 = vrot.lane.b32.xlu0 %v465, 4
        %v523 = vpop.permute.xlu0 %522
        %vm525 = vcmask 31744
        %v526 = vsel %vm525, %v520, %v523
        %v527 = vmul.f32 %v526, %v516
        %v528 = vadd.f32 %v517, %v527
        %v529 = vmul.f32 %v528, 0.35355338
        %vm530 = vcmask 64512
        %531 = vst.msk [vmem:[%s379] sm:$0xff] %vm530, %v529
        %533 = vrot.lane.b32.xlu0 %v515, 8
        %v534 = vpop.permute.xlu0 %533
        %v536 = vmul.f32 %v465, %v534
        %537 = vrot.lane.b32.xlu0 %v465, 116
        %v538 = vpop.permute.xlu0 %537
        %v540 = vsel %vm525, %v538, %v520
        %v541 = vmul.f32 %v540, %v516
        %543 = vrot.lane.b32.xlu0 %v541, 8
        %v544 = vpop.permute.xlu0 %543
        %v546 = vadd.f32 %v536, %v544
        %v547 = vmul.f32 %v546, 0.35355338
        %549 = vrot.lane.b32.xlu0 %v547, 120
        %v550 = vpop.permute.xlu0 %549
        %s552 = scalar_lea.vmem %s379, 8 [#allocation2]
        %553 = vst.msk [vmem:[%s552] sm:$0xff] %vm530, %v550
        %554 = vrot.lane.b32.xlu0 %v515, 16
        %v555 = vpop.permute.xlu0 %554
        %v557 = vmul.f32 %v465, %v555
        %558 = vrot.lane.b32.xlu0 %v465, 108
        %v559 = vpop.permute.xlu0 %558
        %v561 = vsel %vm525, %v559, %v538
        %v562 = vmul.f32 %v561, %v516
        %564 = vrot.lane.b32.xlu0 %v562, 16
        %v565 = vpop.permute.xlu0 %564
        %v567 = vadd.f32 %v557, %v565
        %v568 = vmul.f32 %v567, 0.35355338
        %570 = vrot.lane.b32.xlu0 %v568, 112
        %v571 = vpop.permute.xlu0 %570
        %s573 = scalar_lea.vmem %s379, 16 [#allocation2]
        %574 = vst.msk [vmem:[%s573] sm:$0xff] %vm530, %v571
        %575 = vrot.lane.b32.xlu0 %v515, 24
        %v576 = vpop.permute.xlu0 %575
        %v578 = vmul.f32 %v465, %v576
        %579 = vrot.lane.b32.xlu0 %v465, 100
        %v580 = vpop.permute.xlu0 %579
        %v582 = vsel %vm525, %v580, %v559
        %v583 = vmul.f32 %v582, %v516
        %585 = vrot.lane.b32.xlu0 %v583, 24
        %v586 = vpop.permute.xlu0 %585
        %v588 = vadd.f32 %v578, %v586
        %v589 = vmul.f32 %v588, 0.35355338
        %591 = vrot.lane.b32.xlu0 %v589, 104
        %v592 = vpop.permute.xlu0 %591
        %s594 = scalar_lea.vmem %s379, 24 [#allocation2]
        %595 = vst.msk [vmem:[%s594] sm:$0xff] %vm530, %v592
        %v596 = vmul.f32 %v489, %v515
        %598 = vrot.lane.b32.xlu0 %v489, 124
        %v599 = vpop.permute.xlu0 %598
        %601 = vrot.lane.b32.xlu0 %v489, 4
        %v602 = vpop.permute.xlu0 %601
        %v604 = vsel %vm525, %v599, %v602
        %v605 = vmul.f32 %v604, %v516
        %v606 = vadd.f32 %v596, %v605
        %607 = vst.msk [vmem:[%s386] sm:$0xff] %vm530, %v606
        %608 = vst.msk [vmem:[%s393] sm:$0xff] %vm530, %v513
        %v609 = vmul.f32 %v489, %v534
        %610 = vrot.lane.b32.xlu0 %v489, 116
        %v611 = vpop.permute.xlu0 %610
        %v613 = vsel %vm525, %v611, %v599
        %v614 = vmul.f32 %v613, %v516
        %616 = vrot.lane.b32.xlu0 %v614, 8
        %v617 = vpop.permute.xlu0 %616
        %v619 = vadd.f32 %v609, %v617
        %621 = vrot.lane.b32.xlu0 %v619, 120
        %v622 = vpop.permute.xlu0 %621
        %s624 = scalar_lea.vmem %s386, 8 [#allocation4]
        %625 = vst.msk [vmem:[%s624] sm:$0xff] %vm530, %v622
        %627 = vrot.lane.b32.xlu0 %v513, 120
        %v628 = vpop.permute.xlu0 %627
        %s630 = scalar_lea.vmem %s393, 8 [#allocation6]
        %631 = vst.msk [vmem:[%s630] sm:$0xff] %vm530, %v628
        %s632 = sand.u32 %s213, 1
        %s633 = scalar_lea.sflag [#allocation3], %s632
        %s634 = sand.u32 %s213, 1
        %s635 = smul.addr %s634, 32
        %s636 = scalar_lea.vmem [#allocation2], %s635
        %s637 = sand.u32 %s27, 1
        %s638 = scalar_lea.sflag [#allocation5], %s637
        %s639 = sand.u32 %s241, 1
        %s640 = smul.addr %s639, 16
        %s641 = scalar_lea.vmem [#allocation4], %s640
        %s642 = sand.u32 %s27, 1
        %s643 = scalar_lea.sflag [#allocation5], %s642
        %s644 = sand.u32 %s269, 1
        %s645 = smul.addr %s644, 16
        %s646 = scalar_lea.vmem [#allocation6], %s645
        // Predicated region
        $region49: #{tpu_custom_call.1} parent=47 // pred_check
          %p647 = pneg %p223
        $region50: #{tpu_custom_call.1} parent=47 // pred_check_branch
          %649 = sbr.rel (%p647) target = $region52
        $region51: #{tpu_custom_call.1} parent=47 // pred_region
          %651 = vsyncadd %s633, 0
          %s652 = smul.addr %s31, 4
          %s653 = sadd.s32 %s32, %s652
          %s654 = smul.addr %s653, 8
          %s655 = scalar_lea.hbm %s7, %s654
          %s656 = sshll.u32 %s636, 4
          %s657 = int_to_ptr.vmem [resolvable:$true] %s656
          %s658 = sshll.u32 %s655, 4
          %s659 = int_to_ptr.hbm [resolvable:$true] %s658
          %664 = dma.vmem_to_hbm [thread:$0]  %s657, 512, %s659, %s633, 128, 128, 8
        $region52: #{tpu_custom_call.1} parent=47 // pred_fallthru
          _
        // Predicated region
        $region53: #{tpu_custom_call.1} parent=47 // pred_check
          %p665 = pneg %p251
        $region54: #{tpu_custom_call.1} parent=47 // pred_check_branch
          %667 = sbr.rel (%p665) target = $region56
        $region55: #{tpu_custom_call.1} parent=47 // pred_region
          %669 = vsyncadd %s638, 0
          %s670 = smul.addr %s31, 2
          %s671 = sadd.s32 %s32, %s670
          %s672 = smul.addr %s671, 8
          %s673 = scalar_lea.hbm %s8, %s672
          %s674 = sshll.u32 %s641, 4
          %s675 = int_to_ptr.vmem [resolvable:$true] %s674
          %s676 = sshll.u32 %s673, 4
          %s677 = int_to_ptr.hbm [resolvable:$true] %s676
          %682 = dma.vmem_to_hbm [thread:$0]  %s675, 256, %s677, %s638, 128, 128, 8
        $region56: #{tpu_custom_call.1} parent=47 // pred_fallthru
          _
        // Predicated region
        $region57: #{tpu_custom_call.1} parent=47 // pred_check
          %p683 = pneg %p279
        $region58: #{tpu_custom_call.1} parent=47 // pred_check_branch
          %685 = sbr.rel (%p683) target = $region60
        $region59: #{tpu_custom_call.1} parent=47 // pred_region
          %687 = vsyncadd %s643, 0
          %s688 = smul.addr %s31, 2
          %s689 = sadd.s32 %s32, %s688
          %s690 = smul.addr %s689, 8
          %s691 = scalar_lea.hbm %s9, %s690
          %s692 = sshll.u32 %s646, 4
          %s693 = int_to_ptr.vmem [resolvable:$true] %s692
          %s694 = sshll.u32 %s691, 4
          %s695 = int_to_ptr.hbm [resolvable:$true] %s694
          %700 = dma.vmem_to_hbm [thread:$0]  %s693, 256, %s695, %s643, 128, 128, 8
        $region60: #{tpu_custom_call.1} parent=47 // pred_fallthru
          _
      $region48: #{tpu_custom_call.1} parent=5 // pred_fallthru
        _
      %p701 = scmp.le.s32.totalorder 2, %s22
      // Predicated region
      $region61: #{tpu_custom_call.1} parent=5 // pred_check
        %p702 = pneg %p701
      $region62: #{tpu_custom_call.1} parent=5 // pred_check_branch
        %704 = sbr.rel (%p702) target = $region64
      $region63: #{tpu_custom_call.1} parent=5 // pred_region
        %s705 = ssub.s32 %s22, 2
        // Predicated region
        $region65: #{tpu_custom_call.1} parent=63 // pred_check
          %p706 = pneg %p229
        $region66: #{tpu_custom_call.1} parent=63 // pred_check_branch
          %708 = sbr.rel (%p706) target = $region68
        $region67: #{tpu_custom_call.1} parent=63 // pred_region
          %s709 = sand.u32 %s214, 1
          %s710 = scalar_lea.sflag [#allocation3], %s709
          %s711 = sand.u32 %s214, 1
          %s712 = smul.addr %s711, 32
          %s713 = scalar_lea.vmem [#allocation2], %s712
          %715 = dma.done %s710, 512
        $region68: #{tpu_custom_call.1} parent=63 // pred_fallthru
          _
        // Predicated region
        $region69: #{tpu_custom_call.1} parent=63 // pred_check
          %p716 = pneg %p257
        $region70: #{tpu_custom_call.1} parent=63 // pred_check_branch
          %718 = sbr.rel (%p716) target = $region72
        $region71: #{tpu_custom_call.1} parent=63 // pred_region
          %s719 = sand.u32 %s28, 1
          %s720 = scalar_lea.sflag [#allocation5], %s719
          %s721 = sand.u32 %s242, 1
          %s722 = smul.addr %s721, 16
          %s723 = scalar_lea.vmem [#allocation4], %s722
          %725 = dma.done %s720, 256
        $region72: #{tpu_custom_call.1} parent=63 // pred_fallthru
          _
        // Predicated region
        $region73: #{tpu_custom_call.1} parent=63 // pred_check
          %p726 = pneg %p285
        $region74: #{tpu_custom_call.1} parent=63 // pred_check_branch
          %728 = sbr.rel (%p726) target = $region76
        $region75: #{tpu_custom_call.1} parent=63 // pred_region
          %s729 = sand.u32 %s28, 1
          %s730 = scalar_lea.sflag [#allocation5], %s729
          %s731 = sand.u32 %s270, 1
          %s732 = smul.addr %s731, 16
          %s733 = scalar_lea.vmem [#allocation6], %s732
          %735 = dma.done %s730, 256
        $region76: #{tpu_custom_call.1} parent=63 // pred_fallthru
          _
      $region64: #{tpu_custom_call.1} parent=5 // pred_fallthru
        _
    $region6: #{tpu_custom_call.1} parent=1 // loop_footer
      %s26 = sadd.s32 1, %s22
    $region7: #{tpu_custom_call.1} parent=1 // loop_footer_branch
      %21 = sbr.rel target = $region3
    $region8: #{tpu_custom_call.1} parent=1 // loop_exit
      _
    %736 = vsyncpa [#allocation3], 1
    %s737 = scalar_lea.sflag [#allocation3], 1
    %738 = vsyncpa %s737, 1
    %739 = vsyncpa [#allocation5], 1
    %s740 = scalar_lea.sflag [#allocation5], 1
    %741 = vsyncpa %s740, 1

</llo_original>
